<compile_context>
chip_gen: v6e
topology: v6e:2x2x1
jax: 0.10.0
libtpu: 0.0.40
codegen_flags: <defaults>
</compile_context>

<pallas_src>
import jax
import jax.numpy as jnp
from jax.experimental import pallas as pl
from jax.experimental.pallas import tpu as pltpu

# Synthetic sizes consistent with the module (rule counts are data-derived in
# the original; picked small deterministic values here).
IN_FEATURES = 8      # len(Rules.get_atomic_rules(tree))
HIDDEN_NODES = 5     # len(Rules.get_rules(tree))
OUT_FEATURES = 3
BATCH = 8


def _ru8(n: int) -> int:
    return ((n + 7) // 8) * 8


# Packed-parameter slab layout (rows are 8-aligned so every in-kernel slice
# starts on a sublane-tile boundary; width = max(H, OUT), zero-padded).
_SLAB_COLS = max(HIDDEN_NODES, OUT_FEATURES)
_W1_ROW = 0                                   # W1ᵀ  : (IN, H)
_MASK_ROW = _W1_ROW + _ru8(IN_FEATURES)       # mask : (IN, H)
_B1_ROW = _MASK_ROW + _ru8(IN_FEATURES)       # b1   : (1, H)
_W2_ROW = _B1_ROW + 8                         # W2ᵀ  : (H, OUT)
_B2_ROW = _W2_ROW + _ru8(HIDDEN_NODES)        # b2   : (1, OUT)
_SLAB_ROWS = _B2_ROW + 8


def customnet_kernel(x_ref, p_ref, o_ref):
    # Static slices into the packed parameter slab (no transposes needed).
    w1t = p_ref[_W1_ROW:_W1_ROW + IN_FEATURES, :HIDDEN_NODES]      # (IN, H)
    mask = p_ref[_MASK_ROW:_MASK_ROW + IN_FEATURES, :HIDDEN_NODES]  # (IN, H)
    b1 = p_ref[_B1_ROW:_B1_ROW + 1, :HIDDEN_NODES]                  # (1, H)
    w2t = p_ref[_W2_ROW:_W2_ROW + HIDDEN_NODES, :OUT_FEATURES]      # (H, OUT)
    b2 = p_ref[_B2_ROW:_B2_ROW + 1, :OUT_FEATURES]                  # (1, OUT)

    # fc1 with per-forward weight masking:  x @ (W1ᵀ * mask) + b1
    h = jnp.dot(x_ref[...], w1t * mask,
                preferred_element_type=jnp.float32) + b1            # (B, H)
    # sigmoid (EUP logistic)
    h = jax.nn.sigmoid(h)
    # fc2:  h @ W2ᵀ + b2
    o_ref[...] = jnp.dot(h, w2t,
                         preferred_element_type=jnp.float32) + b2   # (B, OUT)


def pack_params(w1, b1, mask, w2, b2):
    """Pack all parameters into one (ROWS, COLS) f32 slab (layout glue only)."""
    slab = jnp.zeros((_SLAB_ROWS, _SLAB_COLS), jnp.float32)
    slab = slab.at[_W1_ROW:_W1_ROW + IN_FEATURES, :HIDDEN_NODES].set(w1.T)
    slab = slab.at[_MASK_ROW:_MASK_ROW + IN_FEATURES, :HIDDEN_NODES].set(mask)
    slab = slab.at[_B1_ROW, :HIDDEN_NODES].set(b1)
    slab = slab.at[_W2_ROW:_W2_ROW + HIDDEN_NODES, :OUT_FEATURES].set(w2.T)
    slab = slab.at[_B2_ROW, :OUT_FEATURES].set(b2)
    return slab


def customnet_forward(x, w1, b1, mask, w2, b2):
    B = x.shape[0]
    params = pack_params(w1, b1, mask, w2, b2)

    flops = (2 * B * IN_FEATURES * HIDDEN_NODES        # fc1 matmul
             + 2 * B * HIDDEN_NODES * OUT_FEATURES     # fc2 matmul
             + IN_FEATURES * HIDDEN_NODES              # mask multiply
             + B * HIDDEN_NODES + B * OUT_FEATURES)    # bias adds
    bytes_accessed = 4 * (x.size + params.size + B * OUT_FEATURES)

    # Everything is tiny -> single block, no grid; full-array VMEM blocks.
    # TODO(synk): if BATCH/IN/HIDDEN grow, add a batch grid with
    # dimension_semantics=("parallel",) and a lane-dense (>=128) output.
    return pl.pallas_call(
        customnet_kernel,
        out_shape=jax.ShapeDtypeStruct((B, OUT_FEATURES), jnp.float32),
        in_specs=[
            pl.BlockSpec(memory_space=pltpu.VMEM),  # x
            pl.BlockSpec(memory_space=pltpu.VMEM),  # packed params slab
        ],
        out_specs=pl.BlockSpec(memory_space=pltpu.VMEM),
        cost_estimate=pl.CostEstimate(
            flops=flops,
            transcendentals=B * HIDDEN_NODES,   # sigmoid exp
            bytes_accessed=bytes_accessed),
    )(x, params)


def init_params(key):
    k1, k2, k3, k4, k5 = jax.random.split(key, 5)
    # nn.Linear default init: U(-1/sqrt(fan_in), 1/sqrt(fan_in))
    lim1 = 1.0 / jnp.sqrt(IN_FEATURES)
    lim2 = 1.0 / jnp.sqrt(HIDDEN_NODES)
    w1 = jax.random.uniform(k1, (HIDDEN_NODES, IN_FEATURES), jnp.float32, -lim1, lim1)
    b1 = jax.random.uniform(k2, (HIDDEN_NODES,), jnp.float32, -lim1, lim1)
    w2 = jax.random.uniform(k3, (OUT_FEATURES, HIDDEN_NODES), jnp.float32, -lim2, lim2)
    b2 = jax.random.uniform(k4, (OUT_FEATURES,), jnp.float32, -lim2, lim2)
    # binary mask (IN_FEATURES, HIDDEN_NODES), as produced by generate_mask()
    mask = (jax.random.uniform(k5, (IN_FEATURES, HIDDEN_NODES)) < 0.5).astype(jnp.float32)
    return w1, b1, mask, w2, b2


def reference_forward(x, w1, b1, mask, w2, b2):
    w1m = w1 * mask.T
    h = jax.nn.sigmoid(x @ w1m.T + b1)
    return h @ w2.T + b2


if __name__ == "__main__":
    key = jax.random.PRNGKey(0)
    kx, kp = jax.random.split(key)
    x = jax.random.normal(kx, (BATCH, IN_FEATURES), jnp.float32)
    w1, b1, mask, w2, b2 = init_params(kp)

    out = customnet_forward(x, w1, b1, mask, w2, b2)
    out = jax.block_until_ready(out)

    ref = reference_forward(x, w1, b1, mask, w2, b2)
    assert out.shape == (BATCH, OUT_FEATURES)
    assert jnp.allclose(out, ref, atol=1e-5, rtol=1e-5)
    print("KERNEL_OK")
</pallas_src>

<mosaic_0001>
module attributes {stable_mosaic.version = 11 : i64} {
  func.func @customnet_kernel(%arg0: memref<8x8xf32, #tpu.memory_space<vmem>>, %arg1: memref<40x5xf32, #tpu.memory_space<vmem>>, %arg2: memref<8x3xf32, #tpu.memory_space<vmem>>) attributes {dimension_semantics = [], scalar_prefetch = 0 : i64, scratch_operands = 0 : i64, tpu.core_type = #tpu.core_type<tc>} {
    %c0 = arith.constant 0 : index
    %c0_0 = arith.constant 0 : index
    %0 = vector.load %arg1[%c0, %c0_0] : memref<40x5xf32, #tpu.memory_space<vmem>>, vector<8x5xf32>
    %c8 = arith.constant 8 : index
    %c0_1 = arith.constant 0 : index
    %1 = vector.load %arg1[%c8, %c0_1] : memref<40x5xf32, #tpu.memory_space<vmem>>, vector<8x5xf32>
    %c16 = arith.constant 16 : index
    %c0_2 = arith.constant 0 : index
    %2 = vector.load %arg1[%c16, %c0_2] : memref<40x5xf32, #tpu.memory_space<vmem>>, vector<1x5xf32>
    %c24 = arith.constant 24 : index
    %c0_3 = arith.constant 0 : index
    %3 = vector.load %arg1[%c24, %c0_3] : memref<40x5xf32, #tpu.memory_space<vmem>>, vector<5x3xf32>
    %c32 = arith.constant 32 : index
    %c0_4 = arith.constant 0 : index
    %4 = vector.load %arg1[%c32, %c0_4] : memref<40x5xf32, #tpu.memory_space<vmem>>, vector<1x3xf32>
    %c0_5 = arith.constant 0 : index
    %c0_6 = arith.constant 0 : index
    %5 = vector.load %arg0[%c0_5, %c0_6] : memref<8x8xf32, #tpu.memory_space<vmem>>, vector<8x8xf32>
    %6 = arith.mulf %0, %1 : vector<8x5xf32>
    %cst = arith.constant dense<0.000000e+00> : vector<8x5xf32>
    %7 = tpu.matmul %5, %6, %cst {dimension_numbers = #tpu.dot_dimension_numbers<[1], [0], [0], [1], [0, 0, 1, 1], [], []>} : vector<8x8xf32>, vector<8x5xf32>, vector<8x5xf32> -> vector<8x5xf32>
    %8 = vector.broadcast %2 : vector<1x5xf32> to vector<8x5xf32>
    %9 = arith.addf %7, %8 : vector<8x5xf32>
    %10 = arith.negf %9 : vector<8x5xf32>
    %11 = math.exp %10 : vector<8x5xf32>
    %cst_7 = arith.constant 1.000000e+00 : f32
    %12 = vector.broadcast %cst_7 : f32 to vector<8x5xf32>
    %13 = arith.addf %12, %11 : vector<8x5xf32>
    %14 = arith.divf %12, %13 : vector<8x5xf32>
    %cst_8 = arith.constant dense<0.000000e+00> : vector<8x3xf32>
    %15 = tpu.matmul %14, %3, %cst_8 {dimension_numbers = #tpu.dot_dimension_numbers<[1], [0], [0], [1], [0, 0, 1, 1], [], []>} : vector<8x5xf32>, vector<5x3xf32>, vector<8x3xf32> -> vector<8x3xf32>
    %16 = vector.broadcast %4 : vector<1x3xf32> to vector<8x3xf32>
    %17 = arith.addf %15, %16 : vector<8x3xf32>
    %c0_9 = arith.constant 0 : index
    %c0_10 = arith.constant 0 : index
    %18 = vector.load %arg2[%c0_9, %c0_10] : memref<8x3xf32, #tpu.memory_space<vmem>>, vector<8x3xf32>
    tpu.vector_store %arg2[%c0_9, %c0_10], %17 {strides = array<i32>} : memref<8x3xf32, #tpu.memory_space<vmem>>, vector<8x3xf32>,
    return
  }
}

</mosaic_0001>

<llo_original>
// kernel: tpu_custom_call.1
$region0: #{tpu_custom_call.1}
  #allocation0 [shape = 'u32[]', space=smem, size = 0x4, offset = 0x4, fixed_abs, tag = 'smem constant byte address 0x4 - core index']
  #allocation1 [shape = 'u32[144,128]{1,0:T(1,128)}', space=vmem, size = 0x12000, scoped, tag = 'internal scratch']
  %s0 = inlined_call_operand.vmem [shape: f32[8,8], index: 0, kind: input, shape index: {}]
  %s1 = inlined_call_operand.vmem [shape: f32[40,5], index: 1, kind: input, shape index: {}]
  %s2 = inlined_call_operand.vmem [shape: f32[8,3], index: 2, kind: output, shape index: {}]
  %s3 = sld [smem:[#allocation0]]
  $region18: #{tpu_custom_call.1} parent=0
    _
  %s5 = ssub.s32 1, %s3
  %s6 = scalar_select 0, %s5, %s3
  // Predicated region
  $region2: #{tpu_custom_call.1} parent=0 // pred_check
    _
  $region3: #{tpu_custom_call.1} parent=0 // pred_check_branch
    %8 = sbr.rel (0) target = $region5
  $region4: #{tpu_custom_call.1} parent=0 // pred_region
    _
  $region5: #{tpu_custom_call.1} parent=0 // pred_fallthru
    _
  // Predicated region
  $region6: #{tpu_custom_call.1} parent=0 // pred_check
    _
  $region7: #{tpu_custom_call.1} parent=0 // pred_check_branch
    %10 = sbr.rel (0) target = $region9
  $region8: #{tpu_custom_call.1} parent=0 // pred_region
    _
  $region9: #{tpu_custom_call.1} parent=0 // pred_fallthru
    _
  %v11 = vld [vmem:[%s1] sm:$0xff]
  %v12 = vld [vmem:[%s1 + $0x8] sm:$0xff]
  %v13 = vld [vmem:[%s1 + $0x10] sm:$0x1]
  %v14 = vld [vmem:[%s1 + $0x18] sm:$0x1f]
  %v15 = vld [vmem:[%s1 + $0x20] sm:$0x1]
  %v16 = vld [vmem:[%s0] sm:$0xff]
  %v17 = vmul.f32 %v11, %v12
  %v18 = vlaneseq
  %v19 = vshrl.u32 %v18, 7
  %v20 = vsub.s32 0, %v19
  %v21 = vrot.slane %v13, %v20
  %vm22 = vcmask 64512
  %v24 = vsel %vm22, %v16, 0
  %26 = vmatprep.subr.mxu0 0.0
  %27 = vmatpush1.msra.mxu0 0.0
  %28 = vmatprep.subr.mxu0 0.0
  %29 = vmatpush1.msra.mxu0 0.0
  %30 = vmatprep.subr.mxu0 0.0
  %31 = vmatpush1.msra.mxu0 0.0
  %32 = vmatprep.subr.mxu0 0.0
  %33 = vmatpush1.msra.mxu0 0.0
  %34 = vmatprep.subr.mxu0 0.0
  %35 = vmatpush1.msra.mxu0 0.0
  %36 = vmatprep.subr.mxu0 0.0
  %37 = vmatpush1.msra.mxu0 0.0
  %38 = vmatprep.subr.mxu0 0.0
  %39 = vmatpush1.msra.mxu0 0.0
  %40 = vmatprep.subr.mxu0 0.0
  %41 = vmatpush1.msra.mxu0 0.0
  %42 = vmatprep.subr.mxu0 0.0
  %43 = vmatpush1.msra.mxu0 0.0
  %44 = vmatprep.subr.mxu0 0.0
  %45 = vmatpush1.msra.mxu0 0.0
  %46 = vmatprep.subr.mxu0 0.0
  %47 = vmatpush1.msra.mxu0 0.0
  %48 = vmatprep.subr.mxu0 0.0
  %49 = vmatpush1.msra.mxu0 0.0
  %50 = vmatprep.subr.mxu0 0.0
  %51 = vmatpush1.msra.mxu0 0.0
  %52 = vmatprep.subr.mxu0 0.0
  %53 = vmatpush1.msra.mxu0 0.0
  %54 = vmatprep.subr.mxu0 0.0
  %55 = vmatpush1.msra.mxu0 0.0
  %56 = vmatprep.subr.mxu0 0.0
  %57 = vmatpush1.msra.mxu0 %v17
  %58 = vmatprep.subr.mxu0 0.0
  %59 = vmatpush2.msra.mxu0 0.0
  %60 = vmatprep.subr.mxu0 0.0
  %61 = vmatpush2.msra.mxu0 0.0
  %62 = vmatprep.subr.mxu0 0.0
  %63 = vmatpush2.msra.mxu0 0.0
  %64 = vmatprep.subr.mxu0 0.0
  %65 = vmatpush2.msra.mxu0 0.0
  %66 = vmatprep.subr.mxu0 0.0
  %67 = vmatpush2.msra.mxu0 0.0
  %68 = vmatprep.subr.mxu0 0.0
  %69 = vmatpush2.msra.mxu0 0.0
  %70 = vmatprep.subr.mxu0 0.0
  %71 = vmatpush2.msra.mxu0 0.0
  %72 = vmatprep.subr.mxu0 0.0
  %73 = vmatpush2.msra.mxu0 0.0
  %74 = vmatprep.subr.mxu0 0.0
  %75 = vmatpush2.msra.mxu0 0.0
  %76 = vmatprep.subr.mxu0 0.0
  %77 = vmatpush2.msra.mxu0 0.0
  %78 = vmatprep.subr.mxu0 0.0
  %79 = vmatpush2.msra.mxu0 0.0
  %80 = vmatprep.subr.mxu0 0.0
  %81 = vmatpush2.msra.mxu0 0.0
  %82 = vmatprep.subr.mxu0 0.0
  %83 = vmatpush2.msra.mxu0 0.0
  %84 = vmatprep.subr.mxu0 0.0
  %85 = vmatpush2.msra.mxu0 0.0
  %86 = vmatprep.subr.mxu0 0.0
  %87 = vmatpush2.msra.mxu0 0.0
  %88 = vmatprep.subr.mxu0 0.0
  %89 = vmatpush2.msra.mxu0 0.0
  %90 = vmatprep.mubr.f32.mxu0 0.0
  %91 = vmatmul.mubr.f32.gmra.mxu0 %v24
  %v92 = vpop.f32.mrf.mxu0
  %v93 = vadd.f32 %v21, %v92
  %v94 = vpop.f32.mrf.mxu0
  %95 = vdwg.mxu0
  %v96 = vxor.u32 %v93, 2147483648
  %v97 = vmul.f32 %v96, 1.442695
  %v98 = vpow.pop %v97
  %v99 = vadd.f32 %v98, 1.0
  %v100 = vrcp.pop %v99
  %v101 = vmul.f32 1.0, %v100
  %v102 = vlaneseq
  %v103 = vshrl.u32 %v102, 7
  %v104 = vsub.s32 0, %v103
  %v105 = vrot.slane %v15, %v104
  %vm106 = vcmask 39936
  %v108 = vsel %vm106, %v101, 0
  %vm110 = vcmask 1044480
  %v112 = vsel %vm110, %v14, 0
  %114 = vmatprep.subr.mxu0 0.0
  %115 = vmatpush1.msra.mxu0 0.0
  %116 = vmatprep.subr.mxu0 0.0
  %117 = vmatpush1.msra.mxu0 0.0
  %118 = vmatprep.subr.mxu0 0.0
  %119 = vmatpush1.msra.mxu0 0.0
  %120 = vmatprep.subr.mxu0 0.0
  %121 = vmatpush1.msra.mxu0 0.0
  %122 = vmatprep.subr.mxu0 0.0
  %123 = vmatpush1.msra.mxu0 0.0
  %124 = vmatprep.subr.mxu0 0.0
  %125 = vmatpush1.msra.mxu0 0.0
  %126 = vmatprep.subr.mxu0 0.0
  %127 = vmatpush1.msra.mxu0 0.0
  %128 = vmatprep.subr.mxu0 0.0
  %129 = vmatpush1.msra.mxu0 0.0
  %130 = vmatprep.subr.mxu0 0.0
  %131 = vmatpush1.msra.mxu0 0.0
  %132 = vmatprep.subr.mxu0 0.0
  %133 = vmatpush1.msra.mxu0 0.0
  %134 = vmatprep.subr.mxu0 0.0
  %135 = vmatpush1.msra.mxu0 0.0
  %136 = vmatprep.subr.mxu0 0.0
  %137 = vmatpush1.msra.mxu0 0.0
  %138 = vmatprep.subr.mxu0 0.0
  %139 = vmatpush1.msra.mxu0 0.0
  %140 = vmatprep.subr.mxu0 0.0
  %141 = vmatpush1.msra.mxu0 0.0
  %142 = vmatprep.subr.mxu0 0.0
  %143 = vmatpush1.msra.mxu0 0.0
  %144 = vmatprep.subr.mxu0 0.0
  %145 = vmatpush1.msra.mxu0 %v112
  %146 = vmatprep.subr.mxu0 0.0
  %147 = vmatpush2.msra.mxu0 0.0
  %148 = vmatprep.subr.mxu0 0.0
  %149 = vmatpush2.msra.mxu0 0.0
  %150 = vmatprep.subr.mxu0 0.0
  %151 = vmatpush2.msra.mxu0 0.0
  %152 = vmatprep.subr.mxu0 0.0
  %153 = vmatpush2.msra.mxu0 0.0
  %154 = vmatprep.subr.mxu0 0.0
  %155 = vmatpush2.msra.mxu0 0.0
  %156 = vmatprep.subr.mxu0 0.0
  %157 = vmatpush2.msra.mxu0 0.0
  %158 = vmatprep.subr.mxu0 0.0
  %159 = vmatpush2.msra.mxu0 0.0
  %160 = vmatprep.subr.mxu0 0.0
  %161 = vmatpush2.msra.mxu0 0.0
  %162 = vmatprep.subr.mxu0 0.0
  %163 = vmatpush2.msra.mxu0 0.0
  %164 = vmatprep.subr.mxu0 0.0
  %165 = vmatpush2.msra.mxu0 0.0
  %166 = vmatprep.subr.mxu0 0.0
  %167 = vmatpush2.msra.mxu0 0.0
  %168 = vmatprep.subr.mxu0 0.0
  %169 = vmatpush2.msra.mxu0 0.0
  %170 = vmatprep.subr.mxu0 0.0
  %171 = vmatpush2.msra.mxu0 0.0
  %172 = vmatprep.subr.mxu0 0.0
  %173 = vmatpush2.msra.mxu0 0.0
  %174 = vmatprep.subr.mxu0 0.0
  %175 = vmatpush2.msra.mxu0 0.0
  %176 = vmatprep.subr.mxu0 0.0
  %177 = vmatpush2.msra.mxu0 0.0
  %178 = vmatprep.mubr.f32.mxu0 0.0
  %179 = vmatmul.mubr.f32.gmra.mxu0 %v108
  %v180 = vpop.f32.mrf.mxu0
  %v181 = vadd.f32 %v105, %v180
  %v182 = vpop.f32.mrf.mxu0
  %183 = vdwg.mxu0
  %vm184 = vcmask 23552
  %185 = vst.msk [vmem:[%s2] sm:$0xff] %vm184, %v181
  // Predicated region
  $region10: #{tpu_custom_call.1} parent=0 // pred_check
    _
  $region11: #{tpu_custom_call.1} parent=0 // pred_check_branch
    %187 = sbr.rel (0) target = $region13
  $region12: #{tpu_custom_call.1} parent=0 // pred_region
    _
  $region13: #{tpu_custom_call.1} parent=0 // pred_fallthru
    _
  // Predicated region
  $region14: #{tpu_custom_call.1} parent=0 // pred_check
    _
  $region15: #{tpu_custom_call.1} parent=0 // pred_check_branch
    %189 = sbr.rel (0) target = $region17
  $region16: #{tpu_custom_call.1} parent=0 // pred_region
    _
  $region17: #{tpu_custom_call.1} parent=0 // pred_fallthru
    _

</llo_original>
